<compile_context>
chip_gen: v5e
topology: v5e:2x2
jax: 0.10.0
libtpu: 0.0.40
codegen_flags: <defaults>
</compile_context>

<pallas_src>
import functools

import jax
import jax.numpy as jnp
import numpy as np
from jax.experimental import pallas as pl
from jax.experimental.pallas import tpu as pltpu

LN_EPS = 1e-5  # torch.nn.LayerNorm default

COL_TILE_TARGET_BYTES = 2 * 1024 * 1024  # streamed final-weight tile (bf16)
N_TILE_TARGET_BYTES = 4 * 1024 * 1024    # streamed x tile in BatchLinear (f32)


def _round_up(x, m):
    return (x + m - 1) // m * m


def _vmem_limit_bytes(default=48 * 1024 * 1024):
    """Per-generation VMEM limit: ~3/4 of physical, capped at 100 MiB."""
    try:
        cap = getattr(pltpu.get_tpu_info(), "vmem_capacity_bytes", None)
    except Exception:
        cap = None
    if not cap:
        return default
    return int(min(cap * 3 // 4, 100 * 1024 * 1024))


# ---------------------------------------------------------------------------
# Kernel 1: the hypernetwork MLP (FCBlock), column-tiled over the final Linear
# ---------------------------------------------------------------------------
def _hyper_mlp_kernel(n_fc, x_ref, *refs):
    """refs layout:
         [w, b, gamma, beta] * n_fc     hidden FC layers (tiny, whole in VMEM)
         wf, bf                         final-layer column tile (weights+biases head)
         out                            output column tile (bf16)
    """
    fc_refs = refs[: 4 * n_fc]
    wf_ref, bf_ref, out_ref = refs[4 * n_fc], refs[4 * n_fc + 1], refs[4 * n_fc + 2]

    # Hidden MLP ([Linear -> LayerNorm -> ReLU] stack): a few (B, hidden) f32
    # matmuls, recomputed every column tile so the grid axis is embarrassingly
    # parallel (no carried VMEM scratch, no pl.when init) -> safe for megacore.
    h = x_ref[...].astype(jnp.float32)
    for l in range(n_fc):
        w, b, g, be = fc_refs[4 * l: 4 * l + 4]
        z = jnp.dot(h, w[...], preferred_element_type=jnp.float32) + b[...]
        mu = jnp.mean(z, axis=-1, keepdims=True)
        var = jnp.mean((z - mu) ** 2, axis=-1, keepdims=True)  # biased var, like torch LN
        z = (z - mu) * jax.lax.rsqrt(var + LN_EPS) * g[...] + be[...]
        h = jnp.maximum(z, 0.0)

    # One lane-dense column tile of the big final Linear: bf16 operands,
    # f32 accumulation, bf16 write-back (halves HBM writeback vs f32).
    out_ref[...] = (jnp.dot(h.astype(jnp.bfloat16), wf_ref[...],
                            preferred_element_type=jnp.float32)
                    + bf_ref[...]).astype(out_ref.dtype)


def hyper_mlp_pallas(hyper_input, kp):
    """Run the FCBlock hypernetwork. Returns the padded (B, p_pad) bf16 output."""
    B = hyper_input.shape[0]
    fc = kp["fc_layers"]
    n_fc = len(fc)
    hidden = fc[-1][0].shape[1]
    wf, bf = kp["wf"], kp["bf"]
    p_pad = wf.shape[1]
    tc = kp["col_tile"]
    n_tiles = p_pad // tc

    # NOTE: grid-invariant inputs below are double-buffered by default; they are
    # only a few tens of KiB here so we skip pipeline_mode hygiene.
    flat = []
    in_specs = [pl.BlockSpec(hyper_input.shape, lambda j: (0, 0))]
    for (w, b, g, be) in fc:
        flat += [w, b, g, be]
        in_specs += [pl.BlockSpec(w.shape, lambda j: (0, 0)),
                     pl.BlockSpec(b.shape, lambda j: (0, 0)),
                     pl.BlockSpec(g.shape, lambda j: (0, 0)),
                     pl.BlockSpec(be.shape, lambda j: (0, 0))]
    flat += [wf, bf]
    in_specs += [pl.BlockSpec((hidden, tc), lambda j: (0, j)),
                 pl.BlockSpec((1, tc), lambda j: (0, j))]

    mlp_flops = 2 * B * sum(int(w.shape[0]) * int(w.shape[1]) for (w, _, _, _) in fc)
    flops = n_tiles * mlp_flops + 2 * B * hidden * p_pad
    bytes_accessed = int(
        hyper_input.size * hyper_input.dtype.itemsize
        + sum(int(np.prod(a.shape)) * a.dtype.itemsize for a in flat)
        + B * p_pad * 2)

    return pl.pallas_call(
        functools.partial(_hyper_mlp_kernel, n_fc),
        out_shape=jax.ShapeDtypeStruct((B, p_pad), jnp.bfloat16),
        grid=(n_tiles,),
        in_specs=in_specs,
        out_specs=pl.BlockSpec((B, tc), lambda j: (0, j)),
        compiler_params=pltpu.CompilerParams(
            dimension_semantics=("parallel",),
            vmem_limit_bytes=_vmem_limit_bytes()),
        cost_estimate=pl.CostEstimate(flops=int(flops),
                                      transcendentals=int(B * n_fc * n_tiles),
                                      bytes_accessed=bytes_accessed),
    )(hyper_input, *flat)


# ---------------------------------------------------------------------------
# Kernel 2: BatchLinear.forward  --  y[b] = x[b] @ W[b]^T + bias[b]
# Lane-dense layout: N on the 128-lane axis, channels on sublanes.
# ---------------------------------------------------------------------------
def _batch_linear_kernel(xt_ref, w_ref, bt_ref, o_ref):
    # xt: (1, in_ch, TN)  w: (1, out_ch, in_ch) bf16  bt: (1, out_ch, 1)  o: (1, out_ch, TN)
    x = xt_ref[0].astype(jnp.bfloat16)
    acc = jnp.dot(w_ref[0], x, preferred_element_type=jnp.float32)
    o_ref[0] = (acc + bt_ref[0].astype(jnp.float32)).astype(o_ref.dtype)


def _pick_n_tile(N, in_ch, itemsize, target_bytes):
    """Size the N tile by bytes (~target_bytes of x per tile), lane-aligned."""
    if N <= 128:
        return N
    tn = max(128, (target_bytes // (in_ch * itemsize)) // 128 * 128)
    return int(min(tn, _round_up(N, 128)))


def batch_linear_pallas(x, weights, biases):
    """x: (B, N, in_ch), weights: (B, out_ch, in_ch), biases: (B, 1, out_ch)."""
    B, N, in_ch = x.shape
    out_ch = weights.shape[1]

    # Wrapper-side layout plumbing so the kernel's output last dim is N (lane
    # dense) rather than out_ch (<128 => masked stores).
    x_t = jnp.transpose(x, (0, 2, 1))        # (B, in_ch, N)
    b_t = jnp.transpose(biases, (0, 2, 1))   # (B, out_ch, 1)

    tn = _pick_n_tile(N, in_ch, x.dtype.itemsize, N_TILE_TARGET_BYTES)
    grid = (B, pl.cdiv(N, tn))

    flops = 2 * B * N * in_ch * out_ch
    bytes_accessed = int(x.size * x.dtype.itemsize
                         + weights.size * weights.dtype.itemsize
                         + biases.size * biases.dtype.itemsize
                         + B * N * out_ch * 4)

    y_t = pl.pallas_call(
        _batch_linear_kernel,
        out_shape=jax.ShapeDtypeStruct((B, out_ch, N), jnp.float32),
        grid=grid,
        in_specs=[
            pl.BlockSpec((1, in_ch, tn), lambda b, n: (b, 0, n)),
            pl.BlockSpec((1, out_ch, in_ch), lambda b, n: (b, 0, 0)),
            pl.BlockSpec((1, out_ch, 1), lambda b, n: (b, 0, 0)),
        ],
        out_specs=pl.BlockSpec((1, out_ch, tn), lambda b, n: (b, 0, n)),
        compiler_params=pltpu.CompilerParams(
            dimension_semantics=("parallel", "parallel"),
            vmem_limit_bytes=_vmem_limit_bytes()),
        cost_estimate=pl.CostEstimate(flops=int(flops), transcendentals=0,
                                      bytes_accessed=bytes_accessed),
    )(x_t, weights, b_t)
    return jnp.transpose(y_t, (0, 2, 1))     # (B, N, out_ch), module semantics


# ---------------------------------------------------------------------------
# Parameter construction (deterministic, mirrors HyperLinear.__init__ shapes)
# ---------------------------------------------------------------------------
def make_hyper_linear_params(key, in_ch, out_ch, hyper_in_ch,
                             hyper_num_hidden_layers, hyper_hidden_ch):
    """FCBlock: Linear(hyper_in->hidden)+LN+ReLU, hyper_num_hidden_layers x
    (Linear(hidden->hidden)+LN+ReLU), then Linear(hidden -> in*out + out).
    Linear weights kaiming-normal (fan_in, relu); last layer weights *= 0.1.
    Weights stored pre-transposed as (fan_in, fan_out)."""
    fc_dims = [(hyper_in_ch, hyper_hidden_ch)]
    fc_dims += [(hyper_hidden_ch, hyper_hidden_ch)] * hyper_num_hidden_layers

    fc_layers = []
    for (fan_in, fan_out) in fc_dims:
        key, kw, kb = jax.random.split(key, 3)
        std = float(np.sqrt(2.0 / fan_in))
        w = jax.random.normal(kw, (fan_in, fan_out), jnp.float32) * std
        b = jax.random.normal(kb, (1, fan_out), jnp.float32) * 0.01
        fc_layers.append((w, b, jnp.ones((1, fan_out), jnp.float32),
                          jnp.zeros((1, fan_out), jnp.float32)))

    key, kw, kb = jax.random.split(key, 3)
    fan_in, fan_out = hyper_hidden_ch, in_ch * out_ch + out_ch
    std = float(np.sqrt(2.0 / fan_in))
    final_w = jax.random.normal(kw, (fan_in, fan_out), jnp.float32) * std * 0.1
    final_b = jax.random.normal(kb, (1, fan_out), jnp.float32) * 0.01

    return {"fc_layers": fc_layers, "final_w": final_w, "final_b": final_b,
            "in_ch": in_ch, "out_ch": out_ch}


def prepare_kernel_params(params, *, col_tile_bytes=COL_TILE_TARGET_BYTES):
    """Lane-pad + bf16-cast the big final layer and pick the column tile by bytes.
    The weight and bias columns of the final layer are kept together (single
    padded head) so kernel 1 has a single lane-dense streamed output."""
    in_ch, out_ch = params["in_ch"], params["out_ch"]
    hidden = params["final_w"].shape[0]
    p = in_ch * out_ch + out_ch

    p128 = _round_up(p, 128)
    tc_from_bytes = max(128, (col_tile_bytes // (hidden * 2)) // 128 * 128)
    tc = int(min(tc_from_bytes, p128))
    p_pad = _round_up(p128, tc)

    def pad_cols(a, width):
        return jnp.pad(a, ((0, 0), (0, width - a.shape[1])))

    return {
        "fc_layers": params["fc_layers"],  # tiny -> kept f32 for accuracy
        "wf": pad_cols(params["final_w"], p_pad).astype(jnp.bfloat16),
        "bf": pad_cols(params["final_b"], p_pad),
        "col_tile": tc,
        "in_ch": in_ch,
        "out_ch": out_ch,
    }


def hyper_linear_forward(kernel_params, hyper_input):
    """HyperLinear.forward: returns the predicted BatchLinear (weights, biases)."""
    in_ch, out_ch = kernel_params["in_ch"], kernel_params["out_ch"]
    B = hyper_input.shape[0]
    hypo = hyper_mlp_pallas(hyper_input, kernel_params)          # (B, p_pad) bf16
    wi = in_ch * out_ch
    weights = hypo[:, :wi].reshape(B, out_ch, in_ch)             # bf16 end-to-end
    biases = hypo[:, wi:wi + out_ch].reshape(B, 1, out_ch)
    return weights, biases


# ---------------------------------------------------------------------------
# Pure-JAX f32 references (for correctness check only)
# ---------------------------------------------------------------------------
def _ref_mlp(hyper_input, params):
    h = hyper_input.astype(jnp.float32)
    for (w, b, g, be) in params["fc_layers"]:
        h = h @ w + b
        mu = jnp.mean(h, axis=-1, keepdims=True)
        var = jnp.mean((h - mu) ** 2, axis=-1, keepdims=True)
        h = (h - mu) / jnp.sqrt(var + LN_EPS) * g + be
        h = jnp.maximum(h, 0.0)
    return h @ params["final_w"] + params["final_b"]


def _ref_batch_linear(x, weights, biases):
    return jnp.einsum("bni,boi->bno", x, weights) + biases


if __name__ == "__main__":
    # Small, module-consistent shapes.
    in_ch, out_ch = 16, 8
    hyper_in_ch, hyper_num_hidden_layers, hyper_hidden_ch = 32, 1, 64
    B, N = 2, 8  # B "scenes", N points fed through the predicted BatchLinear

    key = jax.random.PRNGKey(0)
    key, k_params, k_hin, k_x = jax.random.split(key, 4)

    params = make_hyper_linear_params(k_params, in_ch, out_ch, hyper_in_ch,
                                      hyper_num_hidden_layers, hyper_hidden_ch)
    kparams = prepare_kernel_params(params)

    hyper_input = jax.random.normal(k_hin, (B, hyper_in_ch), jnp.float32)
    x = jax.random.normal(k_x, (B, N, in_ch), jnp.float32)

    # HyperLinear.forward -> predicted per-batch linear layer params (bf16).
    weights, biases = hyper_linear_forward(kparams, hyper_input)
    weights, biases = jax.block_until_ready((weights, biases))
    assert weights.shape == (B, out_ch, in_ch)
    assert biases.shape == (B, 1, out_ch)

    # Apply the predicted BatchLinear (BatchLinear.forward) with a Pallas kernel.
    y = jax.block_until_ready(batch_linear_pallas(x, weights, biases))
    assert y.shape == (B, N, out_ch)

    # Correctness vs pure-f32 JAX reference (kernels use bf16 matmul operands and
    # bf16 predicted params, f32 accumulation -> bf16-grade tolerances).
    hypo_ref = _ref_mlp(hyper_input, params)
    w_ref = hypo_ref[..., : in_ch * out_ch].reshape(B, out_ch, in_ch)
    b_ref = hypo_ref[..., in_ch * out_ch: in_ch * out_ch + out_ch].reshape(B, 1, out_ch)
    y_ref = _ref_batch_linear(x, w_ref, b_ref)

    np.testing.assert_allclose(np.asarray(weights.astype(jnp.float32)),
                               np.asarray(w_ref), rtol=5e-2, atol=1e-2)
    np.testing.assert_allclose(np.asarray(biases.astype(jnp.float32)),
                               np.asarray(b_ref), rtol=5e-2, atol=1e-2)
    np.testing.assert_allclose(np.asarray(y), np.asarray(y_ref), rtol=5e-2, atol=2e-2)

    print("KERNEL_OK")
</pallas_src>

<mosaic_0001>
module attributes {stable_mosaic.version = 11 : i64} {
  func.func @_hyper_mlp_kernel(%arg0: i32, %arg1: memref<2x32xf32, #tpu.memory_space<vmem>>, %arg2: memref<32x64xf32, #tpu.memory_space<vmem>>, %arg3: memref<1x64xf32, #tpu.memory_space<vmem>>, %arg4: memref<1x64xf32, #tpu.memory_space<vmem>>, %arg5: memref<1x64xf32, #tpu.memory_space<vmem>>, %arg6: memref<64x64xf32, #tpu.memory_space<vmem>>, %arg7: memref<1x64xf32, #tpu.memory_space<vmem>>, %arg8: memref<1x64xf32, #tpu.memory_space<vmem>>, %arg9: memref<1x64xf32, #tpu.memory_space<vmem>>, %arg10: memref<64x256xbf16, #tpu.memory_space<vmem>>, %arg11: memref<1x256xf32, #tpu.memory_space<vmem>>, %arg12: memref<2x256xbf16, #tpu.memory_space<vmem>>) attributes {dimension_semantics = [#tpu.dimension_semantics<parallel>], iteration_bounds = array<i64: 1>, scalar_prefetch = 0 : i64, scratch_operands = 0 : i64, tpu.core_type = #tpu.core_type<tc>, window_params = [{pipeline_mode = #tpu.pipeline_mode<synchronous>, transform_indices = @transform_0, window_bounds = array<i64: 2, 32>}, {pipeline_mode = #tpu.pipeline_mode<synchronous>, transform_indices = @transform_1, window_bounds = array<i64: 32, 64>}, {pipeline_mode = #tpu.pipeline_mode<synchronous>, transform_indices = @transform_2, window_bounds = array<i64: 1, 64>}, {pipeline_mode = #tpu.pipeline_mode<synchronous>, transform_indices = @transform_3, window_bounds = array<i64: 1, 64>}, {pipeline_mode = #tpu.pipeline_mode<synchronous>, transform_indices = @transform_4, window_bounds = array<i64: 1, 64>}, {pipeline_mode = #tpu.pipeline_mode<synchronous>, transform_indices = @transform_5, window_bounds = array<i64: 64, 64>}, {pipeline_mode = #tpu.pipeline_mode<synchronous>, transform_indices = @transform_6, window_bounds = array<i64: 1, 64>}, {pipeline_mode = #tpu.pipeline_mode<synchronous>, transform_indices = @transform_7, window_bounds = array<i64: 1, 64>}, {pipeline_mode = #tpu.pipeline_mode<synchronous>, transform_indices = @transform_8, window_bounds = array<i64: 1, 64>}, {transform_indices = @transform_9, window_bounds = array<i64: 64, 256>}, {transform_indices = @transform_10, window_bounds = array<i64: 1, 256>}, {transform_indices = @transform_11, window_bounds = array<i64: 2, 256>}]} {
    %c0 = arith.constant 0 : index
    %c0_0 = arith.constant 0 : index
    %0 = vector.load %arg1[%c0, %c0_0] : memref<2x32xf32, #tpu.memory_space<vmem>>, vector<2x32xf32>
    %c0_1 = arith.constant 0 : index
    %c0_2 = arith.constant 0 : index
    %1 = vector.load %arg2[%c0_1, %c0_2] : memref<32x64xf32, #tpu.memory_space<vmem>>, vector<32x64xf32>
    %cst = arith.constant dense<0.000000e+00> : vector<2x64xf32>
    %2 = tpu.matmul %0, %1, %cst {dimension_numbers = #tpu.dot_dimension_numbers<[1], [0], [0], [1], [0, 0, 1, 1], [], []>} : vector<2x32xf32>, vector<32x64xf32>, vector<2x64xf32> -> vector<2x64xf32>
    %c0_3 = arith.constant 0 : index
    %c0_4 = arith.constant 0 : index
    %3 = vector.load %arg3[%c0_3, %c0_4] : memref<1x64xf32, #tpu.memory_space<vmem>>, vector<1x64xf32>
    %4 = vector.broadcast %3 : vector<1x64xf32> to vector<2x64xf32>
    %5 = arith.addf %2, %4 : vector<2x64xf32>
    %cst_5 = arith.constant dense<0.000000e+00> : vector<2xf32>
    %6 = vector.multi_reduction <add>, %5, %cst_5 [1] : vector<2x64xf32> to vector<2xf32>
    %7 = vector.shape_cast %6 : vector<2xf32> to vector<2x1xf32>
    %cst_6 = arith.constant 6.400000e+01 : f32
    %8 = vector.broadcast %cst_6 : f32 to vector<2x1xf32>
    %9 = arith.divf %7, %8 : vector<2x1xf32>
    %10 = vector.broadcast %9 : vector<2x1xf32> to vector<2x64xf32>
    %11 = arith.subf %5, %10 : vector<2x64xf32>
    %12 = arith.mulf %11, %11 : vector<2x64xf32>
    %cst_7 = arith.constant dense<0.000000e+00> : vector<2xf32>
    %13 = vector.multi_reduction <add>, %12, %cst_7 [1] : vector<2x64xf32> to vector<2xf32>
    %14 = vector.shape_cast %13 : vector<2xf32> to vector<2x1xf32>
    %cst_8 = arith.constant 6.400000e+01 : f32
    %15 = vector.broadcast %cst_8 : f32 to vector<2x1xf32>
    %16 = arith.divf %14, %15 : vector<2x1xf32>
    %17 = vector.broadcast %9 : vector<2x1xf32> to vector<2x64xf32>
    %18 = arith.subf %5, %17 : vector<2x64xf32>
    %cst_9 = arith.constant 9.99999974E-6 : f32
    %19 = vector.broadcast %cst_9 : f32 to vector<2x1xf32>
    %20 = arith.addf %16, %19 : vector<2x1xf32>
    %21 = math.rsqrt %20 : vector<2x1xf32>
    %22 = vector.broadcast %21 : vector<2x1xf32> to vector<2x64xf32>
    %23 = arith.mulf %18, %22 : vector<2x64xf32>
    %c0_10 = arith.constant 0 : index
    %c0_11 = arith.constant 0 : index
    %24 = vector.load %arg4[%c0_10, %c0_11] : memref<1x64xf32, #tpu.memory_space<vmem>>, vector<1x64xf32>
    %25 = vector.broadcast %24 : vector<1x64xf32> to vector<2x64xf32>
    %26 = arith.mulf %23, %25 : vector<2x64xf32>
    %c0_12 = arith.constant 0 : index
    %c0_13 = arith.constant 0 : index
    %27 = vector.load %arg5[%c0_12, %c0_13] : memref<1x64xf32, #tpu.memory_space<vmem>>, vector<1x64xf32>
    %28 = vector.broadcast %27 : vector<1x64xf32> to vector<2x64xf32>
    %29 = arith.addf %26, %28 : vector<2x64xf32>
    %cst_14 = arith.constant 0.000000e+00 : f32
    %30 = vector.broadcast %cst_14 : f32 to vector<2x64xf32>
    %31 = arith.maximumf %29, %30 : vector<2x64xf32>
    %c0_15 = arith.constant 0 : index
    %c0_16 = arith.constant 0 : index
    %32 = vector.load %arg6[%c0_15, %c0_16] : memref<64x64xf32, #tpu.memory_space<vmem>>, vector<64x64xf32>
    %cst_17 = arith.constant dense<0.000000e+00> : vector<2x64xf32>
    %33 = tpu.matmul %31, %32, %cst_17 {dimension_numbers = #tpu.dot_dimension_numbers<[1], [0], [0], [1], [0, 0, 1, 1], [], []>} : vector<2x64xf32>, vector<64x64xf32>, vector<2x64xf32> -> vector<2x64xf32>
    %c0_18 = arith.constant 0 : index
    %c0_19 = arith.constant 0 : index
    %34 = vector.load %arg7[%c0_18, %c0_19] : memref<1x64xf32, #tpu.memory_space<vmem>>, vector<1x64xf32>
    %35 = vector.broadcast %34 : vector<1x64xf32> to vector<2x64xf32>
    %36 = arith.addf %33, %35 : vector<2x64xf32>
    %cst_20 = arith.constant dense<0.000000e+00> : vector<2xf32>
    %37 = vector.multi_reduction <add>, %36, %cst_20 [1] : vector<2x64xf32> to vector<2xf32>
    %38 = vector.shape_cast %37 : vector<2xf32> to vector<2x1xf32>
    %cst_21 = arith.constant 6.400000e+01 : f32
    %39 = vector.broadcast %cst_21 : f32 to vector<2x1xf32>
    %40 = arith.divf %38, %39 : vector<2x1xf32>
    %41 = vector.broadcast %40 : vector<2x1xf32> to vector<2x64xf32>
    %42 = arith.subf %36, %41 : vector<2x64xf32>
    %43 = arith.mulf %42, %42 : vector<2x64xf32>
    %cst_22 = arith.constant dense<0.000000e+00> : vector<2xf32>
    %44 = vector.multi_reduction <add>, %43, %cst_22 [1] : vector<2x64xf32> to vector<2xf32>
    %45 = vector.shape_cast %44 : vector<2xf32> to vector<2x1xf32>
    %cst_23 = arith.constant 6.400000e+01 : f32
    %46 = vector.broadcast %cst_23 : f32 to vector<2x1xf32>
    %47 = arith.divf %45, %46 : vector<2x1xf32>
    %48 = vector.broadcast %40 : vector<2x1xf32> to vector<2x64xf32>
    %49 = arith.subf %36, %48 : vector<2x64xf32>
    %cst_24 = arith.constant 9.99999974E-6 : f32
    %50 = vector.broadcast %cst_24 : f32 to vector<2x1xf32>
    %51 = arith.addf %47, %50 : vector<2x1xf32>
    %52 = math.rsqrt %51 : vector<2x1xf32>
    %53 = vector.broadcast %52 : vector<2x1xf32> to vector<2x64xf32>
    %54 = arith.mulf %49, %53 : vector<2x64xf32>
    %c0_25 = arith.constant 0 : index
    %c0_26 = arith.constant 0 : index
    %55 = vector.load %arg8[%c0_25, %c0_26] : memref<1x64xf32, #tpu.memory_space<vmem>>, vector<1x64xf32>
    %56 = vector.broadcast %55 : vector<1x64xf32> to vector<2x64xf32>
    %57 = arith.mulf %54, %56 : vector<2x64xf32>
    %c0_27 = arith.constant 0 : index
    %c0_28 = arith.constant 0 : index
    %58 = vector.load %arg9[%c0_27, %c0_28] : memref<1x64xf32, #tpu.memory_space<vmem>>, vector<1x64xf32>
    %59 = vector.broadcast %58 : vector<1x64xf32> to vector<2x64xf32>
    %60 = arith.addf %57, %59 : vector<2x64xf32>
    %cst_29 = arith.constant 0.000000e+00 : f32
    %61 = vector.broadcast %cst_29 : f32 to vector<2x64xf32>
    %62 = arith.maximumf %60, %61 : vector<2x64xf32>
    %63 = arith.truncf %62 : vector<2x64xf32> to vector<2x64xbf16>
    %c0_30 = arith.constant 0 : index
    %c0_31 = arith.constant 0 : index
    %64 = vector.load %arg10[%c0_30, %c0_31] : memref<64x256xbf16, #tpu.memory_space<vmem>>, vector<64x256xbf16>
    %cst_32 = arith.constant dense<0.000000e+00> : vector<2x256xf32>
    %65 = tpu.matmul %63, %64, %cst_32 {dimension_numbers = #tpu.dot_dimension_numbers<[1], [0], [0], [1], [0, 0, 1, 1], [], []>} : vector<2x64xbf16>, vector<64x256xbf16>, vector<2x256xf32> -> vector<2x256xf32>
    %c0_33 = arith.constant 0 : index
    %c0_34 = arith.constant 0 : index
    %66 = vector.load %arg11[%c0_33, %c0_34] : memref<1x256xf32, #tpu.memory_space<vmem>>, vector<1x256xf32>
    %67 = vector.broadcast %66 : vector<1x256xf32> to vector<2x256xf32>
    %68 = arith.addf %65, %67 : vector<2x256xf32>
    %69 = arith.truncf %68 : vector<2x256xf32> to vector<2x256xbf16>
    %c0_35 = arith.constant 0 : index
    %c0_36 = arith.constant 0 : index
    %70 = vector.load %arg12[%c0_35, %c0_36] : memref<2x256xbf16, #tpu.memory_space<vmem>>, vector<2x256xbf16>
    tpu.vector_store %arg12[%c0_35, %c0_36], %69 {strides = array<i32>} : memref<2x256xbf16, #tpu.memory_space<vmem>>, vector<2x256xbf16>,
    return
  }
  func.func @transform_0(%arg0: i32) -> (i32, i32) {
    %c0_i32 = arith.constant 0 : i32
    %c0_i32_0 = arith.constant 0 : i32
    %c0_i32_1 = arith.constant 0 : i32
    return %c0_i32, %c0_i32_0 : i32, i32
  }
  func.func @transform_1(%arg0: i32) -> (i32, i32) {
    %c0_i32 = arith.constant 0 : i32
    %c0_i32_0 = arith.constant 0 : i32
    %c0_i32_1 = arith.constant 0 : i32
    return %c0_i32, %c0_i32_0 : i32, i32
  }
  func.func @transform_2(%arg0: i32) -> (i32, i32) {
    %c0_i32 = arith.constant 0 : i32
    %c0_i32_0 = arith.constant 0 : i32
    %c0_i32_1 = arith.constant 0 : i32
    return %c0_i32, %c0_i32_0 : i32, i32
  }
  func.func @transform_3(%arg0: i32) -> (i32, i32) {
    %c0_i32 = arith.constant 0 : i32
    %c0_i32_0 = arith.constant 0 : i32
    %c0_i32_1 = arith.constant 0 : i32
    return %c0_i32, %c0_i32_0 : i32, i32
  }
  func.func @transform_4(%arg0: i32) -> (i32, i32) {
    %c0_i32 = arith.constant 0 : i32
    %c0_i32_0 = arith.constant 0 : i32
    %c0_i32_1 = arith.constant 0 : i32
    return %c0_i32, %c0_i32_0 : i32, i32
  }
  func.func @transform_5(%arg0: i32) -> (i32, i32) {
    %c0_i32 = arith.constant 0 : i32
    %c0_i32_0 = arith.constant 0 : i32
    %c0_i32_1 = arith.constant 0 : i32
    return %c0_i32, %c0_i32_0 : i32, i32
  }
  func.func @transform_6(%arg0: i32) -> (i32, i32) {
    %c0_i32 = arith.constant 0 : i32
    %c0_i32_0 = arith.constant 0 : i32
    %c0_i32_1 = arith.constant 0 : i32
    return %c0_i32, %c0_i32_0 : i32, i32
  }
  func.func @transform_7(%arg0: i32) -> (i32, i32) {
    %c0_i32 = arith.constant 0 : i32
    %c0_i32_0 = arith.constant 0 : i32
    %c0_i32_1 = arith.constant 0 : i32
    return %c0_i32, %c0_i32_0 : i32, i32
  }
  func.func @transform_8(%arg0: i32) -> (i32, i32) {
    %c0_i32 = arith.constant 0 : i32
    %c0_i32_0 = arith.constant 0 : i32
    %c0_i32_1 = arith.constant 0 : i32
    return %c0_i32, %c0_i32_0 : i32, i32
  }
  func.func @transform_9(%arg0: i32) -> (i32, i32) {
    %c0_i32 = arith.constant 0 : i32
    %c0_i32_0 = arith.constant 0 : i32
    return %c0_i32, %arg0 : i32, i32
  }
  func.func @transform_10(%arg0: i32) -> (i32, i32) {
    %c0_i32 = arith.constant 0 : i32
    %c0_i32_0 = arith.constant 0 : i32
    return %c0_i32, %arg0 : i32, i32
  }
  func.func @transform_11(%arg0: i32) -> (i32, i32) {
    %c0_i32 = arith.constant 0 : i32
    %c0_i32_0 = arith.constant 0 : i32
    return %c0_i32, %arg0 : i32, i32
  }
}

</mosaic_0001>

<llo_original>
// kernel: tpu_custom_call.1
$region0: #{tpu_custom_call.1}
  #allocation0 [shape = 'u32[]', space=smem, size = 0x4, offset = 0x4, fixed_abs, tag = 'smem constant byte address 0x4 - core index']
  #allocation1 [shape = 'u32[72,128]{1,0:T(1,128)}', space=vmem, size = 0x9000, scoped, tag = 'internal scratch']
  %s0 = inlined_call_operand.hbm [shape: f32[2,32], index: 0, kind: input, shape index: {}]
  %s1 = inlined_call_operand.hbm [shape: f32[32,64], index: 1, kind: input, shape index: {}]
  %s2 = inlined_call_operand.vmem [shape: f32[1,64], index: 2, kind: input, shape index: {}]
  %s3 = inlined_call_operand.hbm [shape: f32[1,64], index: 3, kind: input, shape index: {}]
  %s4 = inlined_call_operand.hbm [shape: f32[1,64], index: 4, kind: input, shape index: {}]
  %s5 = inlined_call_operand.hbm [shape: f32[64,64], index: 5, kind: input, shape index: {}]
  %s6 = inlined_call_operand.vmem [shape: f32[1,64], index: 6, kind: input, shape index: {}]
  %s7 = inlined_call_operand.vmem [shape: f32[1,64], index: 7, kind: input, shape index: {}]
  %s8 = inlined_call_operand.vmem [shape: f32[1,64], index: 8, kind: input, shape index: {}]
  %s9 = inlined_call_operand.hbm [shape: bf16[64,256], index: 9, kind: input, shape index: {}]
  %s10 = inlined_call_operand.vmem [shape: f32[1,256], index: 10, kind: input, shape index: {}]
  %s11 = inlined_call_operand.hbm [shape: bf16[2,256], index: 11, kind: output, shape index: {}]
  %s12 = sld [smem:[#allocation0]]
  $region78: #{tpu_custom_call.1} parent=0
    _
  %s14 = ssub.s32 1, %s12
  %s15 = scalar_select 0, %s14, %s12
  $region1: #{tpu_custom_call.1} parent=0
    #allocation2 [shape = 'u8[1024]{0}', space=vmem, size = 0x400, scoped, tag = 'input window, operand 0, single buffered']
    #allocation3 [shape = 's32[1]{0}', space=sflag, size = 0x4, scoped, tag = 'scoped memory for tpu_custom_call.1']
    #allocation4 [shape = 's32[1]{0}', space=sflag, size = 0x4, scoped, tag = 'scoped memory for tpu_custom_call.1']
    #allocation5 [shape = 'u8[16384]{0}', space=vmem, size = 0x4000, scoped, tag = 'input window, operand 1, single buffered']
    #allocation6 [shape = 's32[1]{0}', space=sflag, size = 0x4, scoped, tag = 'scoped memory for tpu_custom_call.1']
    #allocation7 [shape = 'u8[512]{0}', space=vmem, size = 0x400, scoped, tag = 'input window, operand 3, single buffered']
    #allocation8 [shape = 'u8[512]{0}', space=vmem, size = 0x400, scoped, tag = 'input window, operand 4, single buffered']
    #allocation9 [shape = 's32[1]{0}', space=sflag, size = 0x4, scoped, tag = 'scoped memory for tpu_custom_call.1']
    #allocation10 [shape = 'u8[32768]{0}', space=vmem, size = 0x8000, scoped, tag = 'input window, operand 5, single buffered']
    #allocation11 [shape = 'u8[32768]{0}', space=vmem, size = 0x8000, scoped, tag = 'input window, operand 9, single buffered']
    #allocation12 [shape = 's32[1]{0}', space=sflag, size = 0x4, scoped, tag = 'scoped memory for tpu_custom_call.1']
    #allocation13 [shape = 'u8[1024]{0}', space=vmem, size = 0x400, scoped, tag = 'output window, operand 0, single buffered']
    %16 = vsyncpa [#allocation3], 0
    %17 = vsyncpa [#allocation6], 0
    %18 = vsyncpa [#allocation9], 0
    %19 = vsyncpa [#allocation12], 0
    %20 = vsyncpa [#allocation4], 0
    // Predicated region
    $region2: #{tpu_custom_call.1} parent=1 // pred_check
      _
    $region3: #{tpu_custom_call.1} parent=1 // pred_check_branch
      %22 = sbr.rel (0) target = $region5
    $region4: #{tpu_custom_call.1} parent=1 // pred_region
      %24 = vsyncadd [#allocation3], 0
      %s26 = sshll.u32 %s0, 4
      %s27 = int_to_ptr.hbm [resolvable:$true] %s26
      %s28 = sshll.u32 [#allocation2], 4
      %s29 = int_to_ptr.vmem [resolvable:$true] %s28
      %31 = dma.hbm_to_vmem [thread:$0]  %s27, 32, %s29, [#allocation3]
    $region5: #{tpu_custom_call.1} parent=1 // pred_fallthru
      _
    // Predicated region
    $region6: #{tpu_custom_call.1} parent=1 // pred_check
      _
    $region7: #{tpu_custom_call.1} parent=1 // pred_check_branch
      %33 = sbr.rel (0) target = $region9
    $region8: #{tpu_custom_call.1} parent=1 // pred_region
      %35 = vsyncadd [#allocation6], 0
      %s36 = sshll.u32 %s1, 4
      %s37 = int_to_ptr.hbm [resolvable:$true] %s36
      %s38 = sshll.u32 [#allocation5], 4
      %s39 = int_to_ptr.vmem [resolvable:$true] %s38
      %44 = dma.hbm_to_vmem [thread:$0]  %s37, 512, %s39, [#allocation6], 128, 128, 8
    $region9: #{tpu_custom_call.1} parent=1 // pred_fallthru
      _
    // Predicated region
    $region10: #{tpu_custom_call.1} parent=1 // pred_check
      _
    $region11: #{tpu_custom_call.1} parent=1 // pred_check_branch
      %46 = sbr.rel (0) target = $region13
    $region12: #{tpu_custom_call.1} parent=1 // pred_region
      _
    $region13: #{tpu_custom_call.1} parent=1 // pred_fallthru
      _
    // Predicated region
    $region14: #{tpu_custom_call.1} parent=1 // pred_check
      _
    $region15: #{tpu_custom_call.1} parent=1 // pred_check_branch
      %48 = sbr.rel (0) target = $region17
    $region16: #{tpu_custom_call.1} parent=1 // pred_region
      %50 = vsyncadd [#allocation6], 0
      %s52 = sshll.u32 %s3, 4
      %s53 = int_to_ptr.hbm [resolvable:$true] %s52
      %s54 = sshll.u32 [#allocation7], 4
      %s55 = int_to_ptr.vmem [resolvable:$true] %s54
      %57 = dma.hbm_to_vmem [thread:$0]  %s53, 16, %s55, [#allocation6]
    $region17: #{tpu_custom_call.1} parent=1 // pred_fallthru
      _
    // Predicated region
    $region18: #{tpu_custom_call.1} parent=1 // pred_check
      _
    $region19: #{tpu_custom_call.1} parent=1 // pred_check_branch
      %59 = sbr.rel (0) target = $region21
    $region20: #{tpu_custom_call.1} parent=1 // pred_region
      %61 = vsyncadd [#allocation9], 0
      %s63 = sshll.u32 %s4, 4
      %s64 = int_to_ptr.hbm [resolvable:$true] %s63
      %s65 = sshll.u32 [#allocation8], 4
      %s66 = int_to_ptr.vmem [resolvable:$true] %s65
      %68 = dma.hbm_to_vmem [thread:$0]  %s64, 16, %s66, [#allocation9]
    $region21: #{tpu_custom_call.1} parent=1 // pred_fallthru
      _
    // Predicated region
    $region22: #{tpu_custom_call.1} parent=1 // pred_check
      _
    $region23: #{tpu_custom_call.1} parent=1 // pred_check_branch
      %70 = sbr.rel (0) target = $region25
    $region24: #{tpu_custom_call.1} parent=1 // pred_region
      %72 = vsyncadd [#allocation9], 0
      %s73 = sshll.u32 %s5, 4
      %s74 = int_to_ptr.hbm [resolvable:$true] %s73
      %s75 = sshll.u32 [#allocation10], 4
      %s76 = int_to_ptr.vmem [resolvable:$true] %s75
      %81 = dma.hbm_to_vmem [thread:$0]  %s74, 1024, %s76, [#allocation9], 128, 128, 8
    $region25: #{tpu_custom_call.1} parent=1 // pred_fallthru
      _
    // Predicated region
    $region26: #{tpu_custom_call.1} parent=1 // pred_check
      _
    $region27: #{tpu_custom_call.1} parent=1 // pred_check_branch
      %83 = sbr.rel (0) target = $region29
    $region28: #{tpu_custom_call.1} parent=1 // pred_region
      _
    $region29: #{tpu_custom_call.1} parent=1 // pred_fallthru
      _
    // Predicated region
    $region30: #{tpu_custom_call.1} parent=1 // pred_check
      _
    $region31: #{tpu_custom_call.1} parent=1 // pred_check_branch
      %85 = sbr.rel (0) target = $region33
    $region32: #{tpu_custom_call.1} parent=1 // pred_region
      _
    $region33: #{tpu_custom_call.1} parent=1 // pred_fallthru
      _
    // Predicated region
    $region34: #{tpu_custom_call.1} parent=1 // pred_check
      _
    $region35: #{tpu_custom_call.1} parent=1 // pred_check_branch
      %87 = sbr.rel (0) target = $region37
    $region36: #{tpu_custom_call.1} parent=1 // pred_region
      _
    $region37: #{tpu_custom_call.1} parent=1 // pred_fallthru
      _
    // Predicated region
    $region38: #{tpu_custom_call.1} parent=1 // pred_check
      _
    $region39: #{tpu_custom_call.1} parent=1 // pred_check_branch
      %89 = sbr.rel (0) target = $region41
    $region40: #{tpu_custom_call.1} parent=1 // pred_region
      %91 = vsyncadd [#allocation12], 0
      %s92 = sshll.u32 %s9, 4
      %s93 = int_to_ptr.hbm [resolvable:$true] %s92
      %s94 = sshll.u32 [#allocation11], 4
      %s95 = int_to_ptr.vmem [resolvable:$true] %s94
      %100 = dma.hbm_to_vmem [thread:$0]  %s93, 1024, %s95, [#allocation12], 128, 128, 8
    $region41: #{tpu_custom_call.1} parent=1 // pred_fallthru
      _
    // Predicated region
    $region42: #{tpu_custom_call.1} parent=1 // pred_check
      _
    $region43: #{tpu_custom_call.1} parent=1 // pred_check_branch
      %102 = sbr.rel (0) target = $region45
    $region44: #{tpu_custom_call.1} parent=1 // pred_region
      _
    $region45: #{tpu_custom_call.1} parent=1 // pred_fallthru
      _
    // Predicated region
    $region46: #{tpu_custom_call.1} parent=1 // pred_check
      _
    $region47: #{tpu_custom_call.1} parent=1 // pred_check_branch
      %104 = sbr.rel (0) target = $region49
    $region48: #{tpu_custom_call.1} parent=1 // pred_region
      %106 = dma.done [#allocation3], 32
    $region49: #{tpu_custom_call.1} parent=1 // pred_fallthru
      _
    // Predicated region
    $region50: #{tpu_custom_call.1} parent=1 // pred_check
      _
    $region51: #{tpu_custom_call.1} parent=1 // pred_check_branch
      %108 = sbr.rel (0) target = $region53
    $region52: #{tpu_custom_call.1} parent=1 // pred_region
      %110 = dma.done [#allocation6], 512
    $region53: #{tpu_custom_call.1} parent=1 // pred_fallthru
      _
    // Predicated region
    $region54: #{tpu_custom_call.1} parent=1 // pred_check
      _
    $region55: #{tpu_custom_call.1} parent=1 // pred_check_branch
      %112 = sbr.rel (0) target = $region57
    $region56: #{tpu_custom_call.1} parent=1 // pred_region
      %114 = dma.done [#allocation6], 16
    $region57: #{tpu_custom_call.1} parent=1 // pred_fallthru
      _
    // Predicated region
    $region58: #{tpu_custom_call.1} parent=1 // pred_check
      _
    $region59: #{tpu_custom_call.1} parent=1 // pred_check_branch
      %116 = sbr.rel (0) target = $region61
    $region60: #{tpu_custom_call.1} parent=1 // pred_region
      %118 = dma.done [#allocation9], 16
    $region61: #{tpu_custom_call.1} parent=1 // pred_fallthru
      _
    // Predicated region
    $region62: #{tpu_custom_call.1} parent=1 // pred_check
      _
    $region63: #{tpu_custom_call.1} parent=1 // pred_check_branch
      %120 = sbr.rel (0) target = $region65
    $region64: #{tpu_custom_call.1} parent=1 // pred_region
      %122 = dma.done [#allocation9], 1024
    $region65: #{tpu_custom_call.1} parent=1 // pred_fallthru
      _
    // Predicated region
    $region66: #{tpu_custom_call.1} parent=1 // pred_check
      _
    $region67: #{tpu_custom_call.1} parent=1 // pred_check_branch
      %124 = sbr.rel (0) target = $region69
    $region68: #{tpu_custom_call.1} parent=1 // pred_region
      %126 = dma.done [#allocation12], 1024
    $region69: #{tpu_custom_call.1} parent=1 // pred_fallthru
      _
    %v128 = vld [vmem:[#allocation2] sm:$0x3]
    %v129 = vld [vmem:[#allocation5] sm:$0xff]
    %v130 = vld [vmem:[#allocation5 + $0x8] sm:$0xff]
    %v131 = vld [vmem:[#allocation5 + $0x10] sm:$0xff]
    %v132 = vld [vmem:[#allocation5 + $0x18] sm:$0xff]
    %v133 = vld [vmem:[%s2] sm:$0x1]
    %v135 = vperm.slane %v133, 0
    %vm137 = vcmask 261120
    %v139 = vsel %vm137, %v128, 0
    %141 = vmatpush.msra.mxu0 0.0
    %142 = vmatpush.msra.mxu0 0.0
    %143 = vmatpush.msra.mxu0 0.0
    %144 = vmatpush.msra.mxu0 0.0
    %145 = vmatpush.msra.mxu0 0.0
    %146 = vmatpush.msra.mxu0 0.0
    %147 = vmatpush.msra.mxu0 0.0
    %148 = vmatpush.msra.mxu0 0.0
    %149 = vmatpush.msra.mxu0 0.0
    %150 = vmatpush.msra.mxu0 0.0
    %151 = vmatpush.msra.mxu0 0.0
    %152 = vmatpush.msra.mxu0 0.0
    %153 = vmatpush.msra.mxu0 %v132
    %154 = vmatpush.msra.mxu0 %v131
    %155 = vmatpush.msra.mxu0 %v130
    %156 = vmatpush.msra.mxu0 %v129
    %157 = vmatmul.f32.gmra.mxu0 %v139
    %v158 = vpop.f32.mrf.mxu0
    %v159 = vadd.f32 %v135, %v158
    %160 = vdwg.mxu0
    %vm161 = vcmask 517120
    %v162 = vsel %vm161, %v159, 0.0
    %163 = vadd.xlane.f32.xlu0 %v162
    %v164 = vpop.xlane.xlu0 %163
    %v165 = vrcp.pop 64.0
    %v166 = vmul.f32 64.0, %v165
    %v167 = vsub.f32 1.0, %v166
    %v168 = vmul.f32 %v165, %v167
    %v169 = vadd.f32 %v165, %v168
    %vm170 = vweird.f32 %v165
    %v171 = vsel %vm170, %v165, %v169
    %v172 = vmul.f32 %v164, %v171
    %v173 = vsub.f32 %v159, %v172
    %v174 = vmul.f32 %v173, %v173
    %v175 = vsel %vm161, %v174, 0.0
    %176 = vadd.xlane.f32.xlu0 %v175
    %v177 = vpop.xlane.xlu0 %176
    %v178 = vmul.f32 %v177, %v171
    %v179 = vadd.f32 %v178, 1e-05
    %v180 = vrsqrt.pop %v179
    %v181 = vmul.f32 %v180, %v179
    %v182 = vmul.f32 %v181, %v180
    %v183 = vmul.f32 0.5, %v182
    %v184 = vsub.f32 1.5, %v183
    %v185 = vmul.f32 %v180, %v184
    %vm186 = vweird.f32 %v179
    %vm187 = vweird.f32 %v180
    %vm188 = vmor %vm186, %vm187
    %v189 = vsel %vm188, %v180, %v185
    %v190 = vmul.f32 %v173, %v189
    %v191 = vld [vmem:[#allocation7] sm:$0x1]
    %v193 = vperm.slane %v191, 0
    %v195 = vmul.f32 %v190, %v193
    %v196 = vld [vmem:[#allocation8] sm:$0x1]
    %v198 = vperm.slane %v196, 0
    %v200 = vadd.f32 %v195, %v198
    %v201 = vmax.f32 %v200, 0.0
    %v202 = vld [vmem:[#allocation10] sm:$0xff]
    %v203 = vld [vmem:[#allocation10 + $0x8] sm:$0xff]
    %v204 = vld [vmem:[#allocation10 + $0x10] sm:$0xff]
    %v205 = vld [vmem:[#allocation10 + $0x18] sm:$0xff]
    %v206 = vld [vmem:[#allocation10 + $0x20] sm:$0xff]
    %v207 = vld [vmem:[#allocation10 + $0x28] sm:$0xff]
    %v208 = vld [vmem:[#allocation10 + $0x30] sm:$0xff]
    %v209 = vld [vmem:[#allocation10 + $0x38] sm:$0xff]
    %v210 = vld [vmem:[%s6] sm:$0x1]
    %v212 = vperm.slane %v210, 0
    %vm214 = vcmask 523264
    %v216 = vsel %vm214, %v201, 0
    %218 = vmatpush.msra.mxu0 0.0
    %219 = vmatpush.msra.mxu0 0.0
    %220 = vmatpush.msra.mxu0 0.0
    %221 = vmatpush.msra.mxu0 0.0
    %222 = vmatpush.msra.mxu0 0.0
    %223 = vmatpush.msra.mxu0 0.0
    %224 = vmatpush.msra.mxu0 0.0
    %225 = vmatpush.msra.mxu0 0.0
    %226 = vmatpush.msra.mxu0 %v209
    %227 = vmatpush.msra.mxu0 %v208
    %228 = vmatpush.msra.mxu0 %v207
    %229 = vmatpush.msra.mxu0 %v206
    %230 = vmatpush.msra.mxu0 %v205
    %231 = vmatpush.msra.mxu0 %v204
    %232 = vmatpush.msra.mxu0 %v203
    %233 = vmatpush.msra.mxu0 %v202
    %234 = vmatmul.f32.gmra.mxu0 %v216
    %v235 = vpop.f32.mrf.mxu0
    %v236 = vadd.f32 %v212, %v235
    %237 = vdwg.mxu0
    %v238 = vsel %vm161, %v236, 0.0
    %239 = vadd.xlane.f32.xlu0 %v238
    %v240 = vpop.xlane.xlu0 %239
    %v241 = vmul.f32 %v240, %v171
    %v242 = vsub.f32 %v236, %v241
    %v243 = vmul.f32 %v242, %v242
    %v244 = vsel %vm161, %v243, 0.0
    %245 = vadd.xlane.f32.xlu0 %v244
    %v246 = vpop.xlane.xlu0 %245
    %v247 = vmul.f32 %v246, %v171
    %v248 = vadd.f32 %v247, 1e-05
    %v249 = vrsqrt.pop %v248
    %v250 = vmul.f32 %v249, %v248
    %v251 = vmul.f32 %v250, %v249
    %v252 = vmul.f32 0.5, %v251
    %v253 = vsub.f32 1.5, %v252
    %v254 = vmul.f32 %v249, %v253
    %vm255 = vweird.f32 %v248
    %vm256 = vweird.f32 %v249
    %vm257 = vmor %vm255, %vm256
    %v258 = vsel %vm257, %v249, %v254
    %v259 = vmul.f32 %v242, %v258
    %v260 = vld [vmem:[%s7] sm:$0x1]
    %v262 = vperm.slane %v260, 0
    %v264 = vmul.f32 %v259, %v262
    %v265 = vld [vmem:[%s8] sm:$0x1]
    %v267 = vperm.slane %v265, 0
    %v269 = vadd.f32 %v264, %v267
    %v270 = vmax.f32 %v269, 0.0
    %v271 = vpack.c.bf16 %v270, %v270
    %v272 = vld [vmem:[#allocation11] sm:$0xff]
    %v273 = vld [vmem:[#allocation11 + $0x8] sm:$0xff]
    %v274 = vld [vmem:[#allocation11 + $0x10] sm:$0xff]
    %v275 = vld [vmem:[#allocation11 + $0x18] sm:$0xff]
    %v276 = vld [vmem:[#allocation11 + $0x20] sm:$0xff]
    %v277 = vld [vmem:[#allocation11 + $0x28] sm:$0xff]
    %v278 = vld [vmem:[#allocation11 + $0x30] sm:$0xff]
    %v279 = vld [vmem:[#allocation11 + $0x38] sm:$0xff]
    %v280 = vld [vmem:[%s10] sm:$0x3]
    %v282 = vperm.slane %v280, 0
    %v283 = vperm.slane %v280, 1
    %v294 = vunpack.c.l.b16 %v272
    %v295 = vunpack.c.h.b16 %v272
    %v296 = vunpack.c.l.b16 %v273
    %v297 = vunpack.c.h.b16 %v273
    %v298 = vunpack.c.l.b16 %v274
    %v299 = vunpack.c.h.b16 %v274
    %v300 = vunpack.c.l.b16 %v275
    %v301 = vunpack.c.h.b16 %v275
    %v302 = vunpack.c.l.b16 %v276
    %v303 = vunpack.c.h.b16 %v276
    %v304 = vunpack.c.l.b16 %v277
    %v305 = vunpack.c.h.b16 %v277
    %v306 = vunpack.c.l.b16 %v278
    %v307 = vunpack.c.h.b16 %v278
    %v308 = vunpack.c.l.b16 %v279
    %v309 = vunpack.c.h.b16 %v279
    %v310 = vpack.c.b16 %v296, %v294
    %v311 = vpack.c.b16 %v297, %v295
    %v312 = vpack.c.b16 %v300, %v298
    %v313 = vpack.c.b16 %v301, %v299
    %v314 = vpack.c.b16 %v304, %v302
    %v315 = vpack.c.b16 %v305, %v303
    %v316 = vpack.c.b16 %v308, %v306
    %v317 = vpack.c.b16 %v309, %v307
    %v327 = vsel %vm214, %v271, 0
    %329 = vmatpush.bf16.msra.mxu0 0
    %330 = vmatpush.bf16.msra.mxu0 0
    %331 = vmatpush.bf16.msra.mxu0 0
    %332 = vmatpush.bf16.msra.mxu0 0
    %333 = vmatpush.bf16.msra.mxu0 %v316
    %334 = vmatpush.bf16.msra.mxu0 %v314
    %335 = vmatpush.bf16.msra.mxu0 %v312
    %336 = vmatpush.bf16.msra.mxu0 %v310
    %337 = vmatmul.bf16.gmra.mxu0 %v327
    %v338 = vpop.f32.mrf.mxu0
    %v339 = vadd.f32 %v282, %v338
    %v340 = vpop.f32.mrf.mxu0
    %341 = vdwg.mxu0
    %342 = vmatpush.bf16.msra.mxu0 0
    %343 = vmatpush.bf16.msra.mxu0 0
    %344 = vmatpush.bf16.msra.mxu0 0
    %345 = vmatpush.bf16.msra.mxu0 0
    %346 = vmatpush.bf16.msra.mxu0 %v317
    %347 = vmatpush.bf16.msra.mxu0 %v315
    %348 = vmatpush.bf16.msra.mxu0 %v313
    %349 = vmatpush.bf16.msra.mxu0 %v311
    %350 = vmatmul.bf16.gmra.mxu0 %v327
    %v351 = vpop.f32.mrf.mxu0
    %v352 = vadd.f32 %v283, %v351
    %v353 = vpop.f32.mrf.mxu0
    %354 = vdwg.mxu0
    %v355 = vpack.c.bf16 %v352, %v339
    %v357 = vrot.slane %v355, 3
    %vm358 = vcmask 1040384
    %v361 = vsel %vm358, %v355, %v357
    %363 = vst [vmem:[#allocation13] sm:$0x3] %v361
    // Predicated region
    $region70: #{tpu_custom_call.1} parent=1 // pred_check
      _
    $region71: #{tpu_custom_call.1} parent=1 // pred_check_branch
      %365 = sbr.rel (0) target = $region73
    $region72: #{tpu_custom_call.1} parent=1 // pred_region
      %367 = vsyncadd [#allocation4], 0
      %s369 = sshll.u32 [#allocation13], 4
      %s370 = int_to_ptr.vmem [resolvable:$true] %s369
      %s371 = sshll.u32 %s11, 4
      %s372 = int_to_ptr.hbm [resolvable:$true] %s371
      %374 = dma.vmem_to_hbm [thread:$0]  %s370, 32, %s372, [#allocation4]
    $region73: #{tpu_custom_call.1} parent=1 // pred_fallthru
      _
    // Predicated region
    $region74: #{tpu_custom_call.1} parent=1 // pred_check
      _
    $region75: #{tpu_custom_call.1} parent=1 // pred_check_branch
      %376 = sbr.rel (0) target = $region77
    $region76: #{tpu_custom_call.1} parent=1 // pred_region
      %378 = dma.done [#allocation4], 32
    $region77: #{tpu_custom_call.1} parent=1 // pred_fallthru
      _
    %379 = vsyncpa [#allocation3], 1
    %380 = vsyncpa [#allocation6], 1
    %381 = vsyncpa [#allocation9], 1
    %382 = vsyncpa [#allocation12], 1
    %383 = vsyncpa [#allocation4], 1

</llo_original>
